<compile_context>
chip_gen: v6e
topology: v6e:2x2x1
jax: 0.10.0
libtpu: 0.0.40
codegen_flags: <defaults>
</compile_context>

<pallas_src>
import functools

import jax
import jax.numpy as jnp
from jax.experimental import pallas as pl
from jax.experimental.pallas import tpu as pltpu


# ----------------------------- config ---------------------------------------
AUDIO_EMBED_DIM = 256   # config.audio_embed_dim
HIDDEN_DIM = 128        # config.hidden_dim
FUSION_EMBED_DIM = 256  # config.fusion_embed_dim


def _round_up(x, m):
    return ((x + m - 1) // m) * m


def _cdiv(a, b):
    return (a + b - 1) // b


# ----------------------------- kernel ---------------------------------------
def _audio_encoder_kernel(x_ref, w1_ref, b1_ref, w2_ref, b2_ref, o_ref):
    """Fused MLP: o = relu(x @ W1 + b1) @ W2 + b2 for one row-tile."""
    x = x_ref[...]                                                # (tm, D_in) bf16
    h = jnp.dot(x, w1_ref[...], preferred_element_type=jnp.float32)
    h = jnp.maximum(h + b1_ref[...], 0.0)                        # f32 bias + ReLU (VPU)
    # TODO(synk): Dropout(0.1) is a no-op in eval mode; train-mode PRNG masking omitted.
    h = h.astype(jnp.bfloat16)                                   # bf16 for 2nd MXU pass
    y = jnp.dot(h, w2_ref[...], preferred_element_type=jnp.float32)
    o_ref[...] = (y + b2_ref[...]).astype(o_ref.dtype)


@functools.partial(jax.jit, static_argnames=("tm", "out_dtype"))
def audio_encoder_forward(audio_features, w1, b1, w2, b2, *,
                          tm=2048, out_dtype=jnp.bfloat16):
    """audio_features: [B, S, D_audio] -> [B, S, D_fusion] (bf16 by default)."""
    B, S, D_in = audio_features.shape
    D_hidden = w1.shape[1]
    D_out = w2.shape[1]
    M = B * S

    # bf16 HBM boundary (f32 accumulation inside the kernel).
    x2d = audio_features.reshape(M, D_in).astype(jnp.bfloat16)
    w1b = w1.astype(jnp.bfloat16)
    w2b = w2.astype(jnp.bfloat16)
    b1f = b1.astype(jnp.float32)
    b2f = b2.astype(jnp.float32)

    # Effective row tile: large (amortizes ~0.35us/step, hits HBM roofline) but
    # capped so the grid has >= 4 steps when M allows it (keeps both v7x
    # TensorCores busy with >= 2 double-buffered iterations each).  Always a
    # multiple of 256 (>= sublane multiple of 8, MXU-row friendly).
    tm_eff = min(_round_up(tm, 256), _round_up(_cdiv(M, 4), 256))
    grid = (_cdiv(M, tm_eff),)   # ragged last block handled by Pallas masking

    flops = 2 * M * (D_in * D_hidden + D_hidden * D_out)
    bytes_accessed = (M * (D_in + D_out) * 2                       # bf16 x + out
                      + (D_in * D_hidden + D_hidden * D_out) * 2   # bf16 weights
                      + (D_hidden + D_out) * 4)                    # f32 biases

    out2d = pl.pallas_call(
        _audio_encoder_kernel,
        out_shape=jax.ShapeDtypeStruct((M, D_out), out_dtype),
        grid_spec=pltpu.PrefetchScalarGridSpec(
            num_scalar_prefetch=0,
            grid=grid,
            in_specs=[
                pl.BlockSpec((tm_eff, D_in), lambda i: (i, 0)),      # x row tile
                pl.BlockSpec((D_in, D_hidden), lambda i: (0, 0)),    # W1 (resident)
                pl.BlockSpec((1, D_hidden), lambda i: (0, 0)),       # b1
                pl.BlockSpec((D_hidden, D_out), lambda i: (0, 0)),   # W2 (resident)
                pl.BlockSpec((1, D_out), lambda i: (0, 0)),          # b2
            ],
            out_specs=pl.BlockSpec((tm_eff, D_out), lambda i: (i, 0)),
        ),
        compiler_params=pltpu.CompilerParams(
            dimension_semantics=("parallel",)),      # megacore sharding on v7x
        cost_estimate=pl.CostEstimate(
            flops=flops, transcendentals=0, bytes_accessed=bytes_accessed),
    )(x2d, w1b, b1f, w2b, b2f)

    return out2d.reshape(B, S, D_out)


# ------------------------- parameter init -----------------------------------
def init_params(key):
    """Deterministic init matching nn.Linear shapes (stored transposed: [in, out])."""
    k1, k2, k3, k4 = jax.random.split(key, 4)
    lim1 = 1.0 / jnp.sqrt(AUDIO_EMBED_DIM)
    lim2 = 1.0 / jnp.sqrt(HIDDEN_DIM)
    w1 = jax.random.uniform(k1, (AUDIO_EMBED_DIM, HIDDEN_DIM), jnp.float32,
                            -lim1, lim1)
    b1 = jax.random.uniform(k2, (1, HIDDEN_DIM), jnp.float32, -lim1, lim1)
    w2 = jax.random.uniform(k3, (HIDDEN_DIM, FUSION_EMBED_DIM), jnp.float32,
                            -lim2, lim2)
    b2 = jax.random.uniform(k4, (1, FUSION_EMBED_DIM), jnp.float32, -lim2, lim2)
    return w1, b1, w2, b2


def reference_forward(x, w1, b1, w2, b2):
    """f32 reference on bf16-rounded inputs/weights (matches kernel's HBM dtype)."""
    xf = x.astype(jnp.bfloat16).astype(jnp.float32)
    w1f = w1.astype(jnp.bfloat16).astype(jnp.float32)
    w2f = w2.astype(jnp.bfloat16).astype(jnp.float32)
    h = jnp.maximum(xf @ w1f + b1[0], 0.0)
    return h @ w2f + b2[0]


def _check(out, ref, tag):
    err = jnp.max(jnp.abs(out.astype(jnp.float32) - ref))
    assert jnp.allclose(out.astype(jnp.float32), ref, atol=2e-2, rtol=2e-2), (
        f"mismatch vs reference ({tag}), max abs err = {err}")


# ------------------------------ main -----------------------------------------
if __name__ == "__main__":
    key = jax.random.PRNGKey(0)
    kx, kx2, kx3, kp = jax.random.split(key, 4)

    w1, b1, w2, b2 = init_params(kp)

    # Test 1: tiny M = 16 rows (single ragged block).
    B, S = 2, 8
    x1 = jax.random.normal(kx, (B, S, AUDIO_EMBED_DIM), jnp.float32)
    out1 = jax.block_until_ready(audio_encoder_forward(x1, w1, b1, w2, b2))
    assert out1.shape == (B, S, FUSION_EMBED_DIM), out1.shape
    _check(out1, reference_forward(x1, w1, b1, w2, b2), "M=16")

    # Test 2: M = 21 rows (odd row count, masked ragged write).
    B2, S2 = 3, 7
    x2 = jax.random.normal(kx2, (B2, S2, AUDIO_EMBED_DIM), jnp.float32)
    out2 = jax.block_until_ready(audio_encoder_forward(x2, w1, b1, w2, b2))
    assert out2.shape == (B2, S2, FUSION_EMBED_DIM), out2.shape
    _check(out2, reference_forward(x2, w1, b1, w2, b2), "M=21")

    # Test 3: M = 1280 rows -> tm_eff=512, grid=(3,): multi-step pipeline,
    # parallel grid axis, and a ragged last block together.
    B3, S3 = 4, 320
    x3 = jax.random.normal(kx3, (B3, S3, AUDIO_EMBED_DIM), jnp.float32)
    out3 = jax.block_until_ready(audio_encoder_forward(x3, w1, b1, w2, b2))
    assert out3.shape == (B3, S3, FUSION_EMBED_DIM), out3.shape
    _check(out3, reference_forward(x3, w1, b1, w2, b2), "M=1280")

    print("KERNEL_OK")
</pallas_src>

<mosaic_0001>
module attributes {stable_mosaic.version = 11 : i64} {
  func.func @_audio_encoder_kernel(%arg0: i32, %arg1: memref<256x256xbf16, #tpu.memory_space<vmem>>, %arg2: memref<256x128xbf16, #tpu.memory_space<vmem>>, %arg3: memref<1x128xf32, #tpu.memory_space<vmem>>, %arg4: memref<128x256xbf16, #tpu.memory_space<vmem>>, %arg5: memref<1x256xf32, #tpu.memory_space<vmem>>, %arg6: memref<256x256xbf16, #tpu.memory_space<vmem>>) attributes {dimension_semantics = [#tpu.dimension_semantics<parallel>], iteration_bounds = array<i64: 1>, scalar_prefetch = 0 : i64, scratch_operands = 0 : i64, tpu.core_type = #tpu.core_type<tc>, window_params = [{transform_indices = @transform_0, window_bounds = array<i64: 256, 256>}, {pipeline_mode = #tpu.pipeline_mode<synchronous>, transform_indices = @transform_1, window_bounds = array<i64: 256, 128>}, {pipeline_mode = #tpu.pipeline_mode<synchronous>, transform_indices = @transform_2, window_bounds = array<i64: 1, 128>}, {pipeline_mode = #tpu.pipeline_mode<synchronous>, transform_indices = @transform_3, window_bounds = array<i64: 128, 256>}, {pipeline_mode = #tpu.pipeline_mode<synchronous>, transform_indices = @transform_4, window_bounds = array<i64: 1, 256>}, {transform_indices = @transform_5, window_bounds = array<i64: 256, 256>}]} {
    %c0 = arith.constant 0 : index
    %c0_0 = arith.constant 0 : index
    %0 = vector.load %arg1[%c0, %c0_0] : memref<256x256xbf16, #tpu.memory_space<vmem>>, vector<256x256xbf16>
    %c0_1 = arith.constant 0 : index
    %c0_2 = arith.constant 0 : index
    %1 = vector.load %arg2[%c0_1, %c0_2] : memref<256x128xbf16, #tpu.memory_space<vmem>>, vector<256x128xbf16>
    %cst = arith.constant dense<0.000000e+00> : vector<256x128xf32>
    %2 = tpu.matmul %0, %1, %cst {dimension_numbers = #tpu.dot_dimension_numbers<[1], [0], [0], [1], [0, 0, 1, 1], [], []>} : vector<256x256xbf16>, vector<256x128xbf16>, vector<256x128xf32> -> vector<256x128xf32>
    %c0_3 = arith.constant 0 : index
    %c0_4 = arith.constant 0 : index
    %3 = vector.load %arg3[%c0_3, %c0_4] : memref<1x128xf32, #tpu.memory_space<vmem>>, vector<1x128xf32>
    %4 = vector.broadcast %3 : vector<1x128xf32> to vector<256x128xf32>
    %5 = arith.addf %2, %4 : vector<256x128xf32>
    %cst_5 = arith.constant 0.000000e+00 : f32
    %6 = vector.broadcast %cst_5 : f32 to vector<256x128xf32>
    %7 = arith.maximumf %5, %6 : vector<256x128xf32>
    %8 = arith.truncf %7 : vector<256x128xf32> to vector<256x128xbf16>
    %c0_6 = arith.constant 0 : index
    %c0_7 = arith.constant 0 : index
    %9 = vector.load %arg4[%c0_6, %c0_7] : memref<128x256xbf16, #tpu.memory_space<vmem>>, vector<128x256xbf16>
    %cst_8 = arith.constant dense<0.000000e+00> : vector<256x256xf32>
    %10 = tpu.matmul %8, %9, %cst_8 {dimension_numbers = #tpu.dot_dimension_numbers<[1], [0], [0], [1], [0, 0, 1, 1], [], []>} : vector<256x128xbf16>, vector<128x256xbf16>, vector<256x256xf32> -> vector<256x256xf32>
    %c0_9 = arith.constant 0 : index
    %c0_10 = arith.constant 0 : index
    %11 = vector.load %arg5[%c0_9, %c0_10] : memref<1x256xf32, #tpu.memory_space<vmem>>, vector<1x256xf32>
    %12 = vector.broadcast %11 : vector<1x256xf32> to vector<256x256xf32>
    %13 = arith.addf %10, %12 : vector<256x256xf32>
    %14 = arith.truncf %13 : vector<256x256xf32> to vector<256x256xbf16>
    %c0_11 = arith.constant 0 : index
    %c0_12 = arith.constant 0 : index
    %15 = vector.load %arg6[%c0_11, %c0_12] : memref<256x256xbf16, #tpu.memory_space<vmem>>, vector<256x256xbf16>
    tpu.vector_store %arg6[%c0_11, %c0_12], %14 {strides = array<i32>} : memref<256x256xbf16, #tpu.memory_space<vmem>>, vector<256x256xbf16>,
    return
  }
  func.func @transform_0(%arg0: i32) -> (i32, i32) {
    %c0_i32 = arith.constant 0 : i32
    %c0_i32_0 = arith.constant 0 : i32
    return %arg0, %c0_i32 : i32, i32
  }
  func.func @transform_1(%arg0: i32) -> (i32, i32) {
    %c0_i32 = arith.constant 0 : i32
    %c0_i32_0 = arith.constant 0 : i32
    %c0_i32_1 = arith.constant 0 : i32
    return %c0_i32, %c0_i32_0 : i32, i32
  }
  func.func @transform_2(%arg0: i32) -> (i32, i32) {
    %c0_i32 = arith.constant 0 : i32
    %c0_i32_0 = arith.constant 0 : i32
    %c0_i32_1 = arith.constant 0 : i32
    return %c0_i32, %c0_i32_0 : i32, i32
  }
  func.func @transform_3(%arg0: i32) -> (i32, i32) {
    %c0_i32 = arith.constant 0 : i32
    %c0_i32_0 = arith.constant 0 : i32
    %c0_i32_1 = arith.constant 0 : i32
    return %c0_i32, %c0_i32_0 : i32, i32
  }
  func.func @transform_4(%arg0: i32) -> (i32, i32) {
    %c0_i32 = arith.constant 0 : i32
    %c0_i32_0 = arith.constant 0 : i32
    %c0_i32_1 = arith.constant 0 : i32
    return %c0_i32, %c0_i32_0 : i32, i32
  }
  func.func @transform_5(%arg0: i32) -> (i32, i32) {
    %c0_i32 = arith.constant 0 : i32
    %c0_i32_0 = arith.constant 0 : i32
    return %arg0, %c0_i32 : i32, i32
  }
}

</mosaic_0001>

<llo_original>
// kernel: audio_encoder_forward.1
$region0: #{audio_encoder_forward.1}
  #allocation0 [shape = 'u32[]', space=smem, size = 0x4, offset = 0x4, fixed_abs, tag = 'smem constant byte address 0x4 - core index']
  #allocation1 [shape = 'u32[144,128]{1,0:T(1,128)}', space=vmem, size = 0x12000, scoped, tag = 'internal scratch']
  %s0 = inlined_call_operand.vmem [shape: bf16[16,256], index: 0, kind: input, shape index: {}]
  %s1 = inlined_call_operand.vmem [shape: bf16[256,128], index: 1, kind: input, shape index: {}]
  %s2 = inlined_call_operand.vmem [shape: f32[1,128], index: 2, kind: input, shape index: {}]
  %s3 = inlined_call_operand.vmem [shape: bf16[128,256], index: 3, kind: input, shape index: {}]
  %s4 = inlined_call_operand.vmem [shape: f32[1,256], index: 4, kind: input, shape index: {}]
  %s5 = inlined_call_operand.hbm [shape: bf16[16,256], index: 5, kind: output, shape index: {}]
  %s6 = sld [smem:[#allocation0]]
  $region30: #{audio_encoder_forward.1} parent=0
    _
  %s8 = ssub.s32 1, %s6
  %s9 = scalar_select 0, %s8, %s6
  $region1: #{audio_encoder_forward.1} parent=0
    #allocation2 [shape = 'u8[131072]{0}', space=vmem, size = 0x20000, scoped, tag = 'output window, operand 0, single buffered']
    #allocation3 [shape = 's32[1]{0}', space=sflag, size = 0x4, scoped, tag = 'scoped memory for audio_encoder_forward.1']
    %10 = vsyncpa [#allocation3], 0
    // Predicated region
    $region2: #{audio_encoder_forward.1} parent=1 // pred_check
      _
    $region3: #{audio_encoder_forward.1} parent=1 // pred_check_branch
      %12 = sbr.rel (0) target = $region5
    $region4: #{audio_encoder_forward.1} parent=1 // pred_region
      _
    $region5: #{audio_encoder_forward.1} parent=1 // pred_fallthru
      _
    // Predicated region
    $region6: #{audio_encoder_forward.1} parent=1 // pred_check
      _
    $region7: #{audio_encoder_forward.1} parent=1 // pred_check_branch
      %14 = sbr.rel (0) target = $region9
    $region8: #{audio_encoder_forward.1} parent=1 // pred_region
      _
    $region9: #{audio_encoder_forward.1} parent=1 // pred_fallthru
      _
    // Predicated region
    $region10: #{audio_encoder_forward.1} parent=1 // pred_check
      _
    $region11: #{audio_encoder_forward.1} parent=1 // pred_check_branch
      %16 = sbr.rel (0) target = $region13
    $region12: #{audio_encoder_forward.1} parent=1 // pred_region
      _
    $region13: #{audio_encoder_forward.1} parent=1 // pred_fallthru
      _
    // Predicated region
    $region14: #{audio_encoder_forward.1} parent=1 // pred_check
      _
    $region15: #{audio_encoder_forward.1} parent=1 // pred_check_branch
      %18 = sbr.rel (0) target = $region17
    $region16: #{audio_encoder_forward.1} parent=1 // pred_region
      _
    $region17: #{audio_encoder_forward.1} parent=1 // pred_fallthru
      _
    // Predicated region
    $region18: #{audio_encoder_forward.1} parent=1 // pred_check
      _
    $region19: #{audio_encoder_forward.1} parent=1 // pred_check_branch
      %20 = sbr.rel (0) target = $region21
    $region20: #{audio_encoder_forward.1} parent=1 // pred_region
      _
    $region21: #{audio_encoder_forward.1} parent=1 // pred_fallthru
      _
    %v22 = vld [vmem:[%s0] sm:$0xff]
    %v23 = vld [vmem:[%s0 + $0x8] sm:$0xff]
    %v24 = vld [vmem:[%s0 + $0x10] sm:$0xff]
    %v25 = vld [vmem:[%s0 + $0x18] sm:$0xff]
    %v26 = vld [vmem:[%s0 + $0x20] sm:$0xff]
    %v27 = vld [vmem:[%s0 + $0x28] sm:$0xff]
    %v28 = vld [vmem:[%s0 + $0x30] sm:$0xff]
    %v29 = vld [vmem:[%s0 + $0x38] sm:$0xff]
    %v30 = vld [vmem:[%s0 + $0x40] sm:$0xff]
    %v31 = vld [vmem:[%s0 + $0x48] sm:$0xff]
    %v32 = vld [vmem:[%s0 + $0x50] sm:$0xff]
    %v33 = vld [vmem:[%s0 + $0x58] sm:$0xff]
    %v34 = vld [vmem:[%s0 + $0x60] sm:$0xff]
    %v35 = vld [vmem:[%s0 + $0x68] sm:$0xff]
    %v36 = vld [vmem:[%s0 + $0x70] sm:$0xff]
    %v37 = vld [vmem:[%s0 + $0x78] sm:$0xff]
    %v38 = vld [vmem:[%s0 + $0x80] sm:$0xff]
    %v39 = vld [vmem:[%s0 + $0x88] sm:$0xff]
    %v40 = vld [vmem:[%s0 + $0x90] sm:$0xff]
    %v41 = vld [vmem:[%s0 + $0x98] sm:$0xff]
    %v42 = vld [vmem:[%s0 + $0xa0] sm:$0xff]
    %v43 = vld [vmem:[%s0 + $0xa8] sm:$0xff]
    %v44 = vld [vmem:[%s0 + $0xb0] sm:$0xff]
    %v45 = vld [vmem:[%s0 + $0xb8] sm:$0xff]
    %v46 = vld [vmem:[%s0 + $0xc0] sm:$0xff]
    %v47 = vld [vmem:[%s0 + $0xc8] sm:$0xff]
    %v48 = vld [vmem:[%s0 + $0xd0] sm:$0xff]
    %v49 = vld [vmem:[%s0 + $0xd8] sm:$0xff]
    %v50 = vld [vmem:[%s0 + $0xe0] sm:$0xff]
    %v51 = vld [vmem:[%s0 + $0xe8] sm:$0xff]
    %v52 = vld [vmem:[%s0 + $0xf0] sm:$0xff]
    %v53 = vld [vmem:[%s0 + $0xf8] sm:$0xff]
    %v54 = vld [vmem:[%s1] sm:$0xf]
    %v55 = vld [vmem:[%s1 + $0x4] sm:$0xf]
    %v56 = vld [vmem:[%s1 + $0x8] sm:$0xf]
    %v57 = vld [vmem:[%s1 + $0xc] sm:$0xf]
    %v58 = vld [vmem:[%s1 + $0x10] sm:$0xf]
    %v59 = vld [vmem:[%s1 + $0x14] sm:$0xf]
    %v60 = vld [vmem:[%s1 + $0x18] sm:$0xf]
    %v61 = vld [vmem:[%s1 + $0x1c] sm:$0xf]
    %v62 = vld [vmem:[%s1 + $0x20] sm:$0xf]
    %v63 = vld [vmem:[%s1 + $0x24] sm:$0xf]
    %v64 = vld [vmem:[%s1 + $0x28] sm:$0xf]
    %v65 = vld [vmem:[%s1 + $0x2c] sm:$0xf]
    %v66 = vld [vmem:[%s1 + $0x30] sm:$0xf]
    %v67 = vld [vmem:[%s1 + $0x34] sm:$0xf]
    %v68 = vld [vmem:[%s1 + $0x38] sm:$0xf]
    %v69 = vld [vmem:[%s1 + $0x3c] sm:$0xf]
    %v70 = vld [vmem:[%s1 + $0x40] sm:$0xf]
    %v71 = vld [vmem:[%s1 + $0x44] sm:$0xf]
    %v72 = vld [vmem:[%s1 + $0x48] sm:$0xf]
    %v73 = vld [vmem:[%s1 + $0x4c] sm:$0xf]
    %v74 = vld [vmem:[%s1 + $0x50] sm:$0xf]
    %v75 = vld [vmem:[%s1 + $0x54] sm:$0xf]
    %v76 = vld [vmem:[%s1 + $0x58] sm:$0xf]
    %v77 = vld [vmem:[%s1 + $0x5c] sm:$0xf]
    %v78 = vld [vmem:[%s1 + $0x60] sm:$0xf]
    %v79 = vld [vmem:[%s1 + $0x64] sm:$0xf]
    %v80 = vld [vmem:[%s1 + $0x68] sm:$0xf]
    %v81 = vld [vmem:[%s1 + $0x6c] sm:$0xf]
    %v82 = vld [vmem:[%s1 + $0x70] sm:$0xf]
    %v83 = vld [vmem:[%s1 + $0x74] sm:$0xf]
    %v84 = vld [vmem:[%s1 + $0x78] sm:$0xf]
    %v85 = vld [vmem:[%s1 + $0x7c] sm:$0xf]
    %v86 = vld [vmem:[%s2] sm:$0x1]
    %v88 = vlaneseq
    %v89 = vshrl.u32 %v88, 7
    %v90 = vsub.s32 0, %v89
    %v91 = vrot.slane %v86, %v90
    %v125 = vunpack.c.l.b16 %v22
    %v126 = vunpack.c.h.b16 %v22
    %v127 = vunpack.c.l.b16 %v23
    %v128 = vunpack.c.h.b16 %v23
    %v129 = vunpack.c.l.b16 %v24
    %v130 = vunpack.c.h.b16 %v24
    %v131 = vunpack.c.l.b16 %v25
    %v132 = vunpack.c.h.b16 %v25
    %v133 = vunpack.c.l.b16 %v26
    %v134 = vunpack.c.h.b16 %v26
    %v135 = vunpack.c.l.b16 %v27
    %v136 = vunpack.c.h.b16 %v27
    %v137 = vunpack.c.l.b16 %v28
    %v138 = vunpack.c.h.b16 %v28
    %v139 = vunpack.c.l.b16 %v29
    %v140 = vunpack.c.h.b16 %v29
    %v141 = vunpack.c.l.b16 %v30
    %v142 = vunpack.c.h.b16 %v30
    %v143 = vunpack.c.l.b16 %v31
    %v144 = vunpack.c.h.b16 %v31
    %v145 = vunpack.c.l.b16 %v32
    %v146 = vunpack.c.h.b16 %v32
    %v147 = vunpack.c.l.b16 %v33
    %v148 = vunpack.c.h.b16 %v33
    %v149 = vunpack.c.l.b16 %v34
    %v150 = vunpack.c.h.b16 %v34
    %v151 = vunpack.c.l.b16 %v35
    %v152 = vunpack.c.h.b16 %v35
    %v153 = vunpack.c.l.b16 %v36
    %v154 = vunpack.c.h.b16 %v36
    %v155 = vunpack.c.l.b16 %v37
    %v156 = vunpack.c.h.b16 %v37
    %v157 = vunpack.c.l.b16 %v38
    %v158 = vunpack.c.h.b16 %v38
    %v159 = vunpack.c.l.b16 %v39
    %v160 = vunpack.c.h.b16 %v39
    %v161 = vunpack.c.l.b16 %v40
    %v162 = vunpack.c.h.b16 %v40
    %v163 = vunpack.c.l.b16 %v41
    %v164 = vunpack.c.h.b16 %v41
    %v165 = vunpack.c.l.b16 %v42
    %v166 = vunpack.c.h.b16 %v42
    %v167 = vunpack.c.l.b16 %v43
    %v168 = vunpack.c.h.b16 %v43
    %v169 = vunpack.c.l.b16 %v44
    %v170 = vunpack.c.h.b16 %v44
    %v171 = vunpack.c.l.b16 %v45
    %v172 = vunpack.c.h.b16 %v45
    %v173 = vunpack.c.l.b16 %v46
    %v174 = vunpack.c.h.b16 %v46
    %v175 = vunpack.c.l.b16 %v47
    %v176 = vunpack.c.h.b16 %v47
    %v177 = vunpack.c.l.b16 %v48
    %v178 = vunpack.c.h.b16 %v48
    %v179 = vunpack.c.l.b16 %v49
    %v180 = vunpack.c.h.b16 %v49
    %v181 = vunpack.c.l.b16 %v50
    %v182 = vunpack.c.h.b16 %v50
    %v183 = vunpack.c.l.b16 %v51
    %v184 = vunpack.c.h.b16 %v51
    %v185 = vunpack.c.l.b16 %v52
    %v186 = vunpack.c.h.b16 %v52
    %v187 = vunpack.c.l.b16 %v53
    %v188 = vunpack.c.h.b16 %v53
    %v189 = vpack.c.b16 %v127, %v125
    %v190 = vpack.c.b16 %v128, %v126
    %v191 = vpack.c.b16 %v131, %v129
    %v192 = vpack.c.b16 %v132, %v130
    %v193 = vpack.c.b16 %v135, %v133
    %v194 = vpack.c.b16 %v136, %v134
    %v195 = vpack.c.b16 %v139, %v137
    %v196 = vpack.c.b16 %v140, %v138
    %v197 = vpack.c.b16 %v143, %v141
    %v198 = vpack.c.b16 %v144, %v142
    %v199 = vpack.c.b16 %v147, %v145
    %v200 = vpack.c.b16 %v148, %v146
    %v201 = vpack.c.b16 %v151, %v149
    %v202 = vpack.c.b16 %v152, %v150
    %v203 = vpack.c.b16 %v155, %v153
    %v204 = vpack.c.b16 %v156, %v154
    %v205 = vpack.c.b16 %v159, %v157
    %v206 = vpack.c.b16 %v160, %v158
    %v207 = vpack.c.b16 %v163, %v161
    %v208 = vpack.c.b16 %v164, %v162
    %v209 = vpack.c.b16 %v167, %v165
    %v210 = vpack.c.b16 %v168, %v166
    %v211 = vpack.c.b16 %v171, %v169
    %v212 = vpack.c.b16 %v172, %v170
    %v213 = vpack.c.b16 %v175, %v173
    %v214 = vpack.c.b16 %v176, %v174
    %v215 = vpack.c.b16 %v179, %v177
    %v216 = vpack.c.b16 %v180, %v178
    %v217 = vpack.c.b16 %v183, %v181
    %v218 = vpack.c.b16 %v184, %v182
    %v219 = vpack.c.b16 %v187, %v185
    %v220 = vpack.c.b16 %v188, %v186
    %v285 = vunpack.c.l.b16 %v54
    %v286 = vunpack.c.l.b16 %v55
    %v287 = vunpack.c.l.b16 %v56
    %v288 = vunpack.c.l.b16 %v57
    %v289 = vunpack.c.l.b16 %v58
    %v290 = vunpack.c.l.b16 %v59
    %v291 = vunpack.c.l.b16 %v60
    %v292 = vunpack.c.l.b16 %v61
    %v293 = vunpack.c.l.b16 %v62
    %v294 = vunpack.c.l.b16 %v63
    %v295 = vunpack.c.l.b16 %v64
    %v296 = vunpack.c.l.b16 %v65
    %v297 = vunpack.c.l.b16 %v66
    %v298 = vunpack.c.l.b16 %v67
    %v299 = vunpack.c.l.b16 %v68
    %v300 = vunpack.c.l.b16 %v69
    %v301 = vunpack.c.l.b16 %v70
    %v302 = vunpack.c.l.b16 %v71
    %v303 = vunpack.c.l.b16 %v72
    %v304 = vunpack.c.l.b16 %v73
    %v305 = vunpack.c.l.b16 %v74
    %v306 = vunpack.c.l.b16 %v75
    %v307 = vunpack.c.l.b16 %v76
    %v308 = vunpack.c.l.b16 %v77
    %v309 = vunpack.c.l.b16 %v78
    %v310 = vunpack.c.l.b16 %v79
    %v311 = vunpack.c.l.b16 %v80
    %v312 = vunpack.c.l.b16 %v81
    %v313 = vunpack.c.l.b16 %v82
    %v314 = vunpack.c.l.b16 %v83
    %v315 = vunpack.c.l.b16 %v84
    %v316 = vunpack.c.l.b16 %v85
    %v317 = vpack.c.b16 %v286, %v285
    %v318 = vpack.c.b16 %v288, %v287
    %v319 = vpack.c.b16 %v290, %v289
    %v320 = vpack.c.b16 %v292, %v291
    %v321 = vpack.c.b16 %v294, %v293
    %v322 = vpack.c.b16 %v296, %v295
    %v323 = vpack.c.b16 %v298, %v297
    %v324 = vpack.c.b16 %v300, %v299
    %v325 = vpack.c.b16 %v302, %v301
    %v326 = vpack.c.b16 %v304, %v303
    %v327 = vpack.c.b16 %v306, %v305
    %v328 = vpack.c.b16 %v308, %v307
    %v329 = vpack.c.b16 %v310, %v309
    %v330 = vpack.c.b16 %v312, %v311
    %v331 = vpack.c.b16 %v314, %v313
    %v332 = vpack.c.b16 %v316, %v315
    %349 = vmatprep.subr.bf16.mxu0 0
    %350 = vmatpush1.bf16.msra.mxu0 %v324
    %351 = vmatprep.subr.bf16.mxu0 0
    %352 = vmatpush1.bf16.msra.mxu0 %v323
    %353 = vmatprep.subr.bf16.mxu0 0
    %354 = vmatpush1.bf16.msra.mxu0 %v322
    %355 = vmatprep.subr.bf16.mxu0 0
    %356 = vmatpush1.bf16.msra.mxu0 %v321
    %357 = vmatprep.subr.bf16.mxu0 0
    %358 = vmatpush1.bf16.msra.mxu0 %v320
    %359 = vmatprep.subr.bf16.mxu0 0
    %360 = vmatpush1.bf16.msra.mxu0 %v319
    %361 = vmatprep.subr.bf16.mxu0 0
    %362 = vmatpush1.bf16.msra.mxu0 %v318
    %363 = vmatprep.subr.bf16.mxu0 0
    %364 = vmatpush1.bf16.msra.mxu0 %v317
    %365 = vmatprep.subr.bf16.mxu0 0
    %366 = vmatpush2.bf16.msra.mxu0 %v332
    %367 = vmatprep.subr.bf16.mxu0 0
    %368 = vmatpush2.bf16.msra.mxu0 %v331
    %369 = vmatprep.subr.bf16.mxu0 0
    %370 = vmatpush2.bf16.msra.mxu0 %v330
    %371 = vmatprep.subr.bf16.mxu0 0
    %372 = vmatpush2.bf16.msra.mxu0 %v329
    %373 = vmatprep.subr.bf16.mxu0 0
    %374 = vmatpush2.bf16.msra.mxu0 %v328
    %375 = vmatprep.subr.bf16.mxu0 0
    %376 = vmatpush2.bf16.msra.mxu0 %v327
    %377 = vmatprep.subr.bf16.mxu0 0
    %378 = vmatpush2.bf16.msra.mxu0 %v326
    %379 = vmatprep.subr.bf16.mxu0 0
    %380 = vmatpush2.bf16.msra.mxu0 %v325
    %381 = vmatprep.mubr.bf16.mxu0 %v190
    %382 = vmatmul.mubr.bf16.gmra.mxu0 %v189
    %v383 = vpop.f32.mrf.mxu0
    %v384 = vadd.f32 %v91, %v383
    %v385 = vpop.f32.mrf.mxu0
    %v386 = vpop.f32.mrf.mxu0
    %v387 = vadd.f32 %v91, %v386
    %v388 = vpop.f32.mrf.mxu0
    %389 = vmatprep.mubr.bf16.mxu0 %v192
    %390 = vmatmul.mubr.bf16.gmra.mxu0 %v191
    %v391 = vpop.f32.mrf.mxu0
    %v392 = vadd.f32 %v91, %v391
    %v393 = vpop.f32.mrf.mxu0
    %v394 = vpop.f32.mrf.mxu0
    %v395 = vadd.f32 %v91, %v394
    %v396 = vpop.f32.mrf.mxu0
    %397 = vmatprep.mubr.bf16.mxu0 %v194
    %398 = vmatmul.mubr.bf16.gmra.mxu0 %v193
    %v399 = vpop.f32.mrf.mxu0
    %v400 = vadd.f32 %v91, %v399
    %v401 = vpop.f32.mrf.mxu0
    %v402 = vpop.f32.mrf.mxu0
    %v403 = vadd.f32 %v91, %v402
    %v404 = vpop.f32.mrf.mxu0
    %405 = vmatprep.mubr.bf16.mxu0 %v196
    %406 = vmatmul.mubr.bf16.gmra.mxu0 %v195
    %v407 = vpop.f32.mrf.mxu0
    %v408 = vadd.f32 %v91, %v407
    %v409 = vpop.f32.mrf.mxu0
    %v410 = vpop.f32.mrf.mxu0
    %v411 = vadd.f32 %v91, %v410
    %v412 = vpop.f32.mrf.mxu0
    %413 = vmatprep.mubr.bf16.mxu0 %v198
    %414 = vmatmul.mubr.bf16.gmra.mxu0 %v197
    %v415 = vpop.f32.mrf.mxu0
    %v416 = vadd.f32 %v91, %v415
    %v417 = vpop.f32.mrf.mxu0
    %v418 = vpop.f32.mrf.mxu0
    %v419 = vadd.f32 %v91, %v418
    %v420 = vpop.f32.mrf.mxu0
    %421 = vmatprep.mubr.bf16.mxu0 %v200
    %422 = vmatmul.mubr.bf16.gmra.mxu0 %v199
    %v423 = vpop.f32.mrf.mxu0
    %v424 = vadd.f32 %v91, %v423
    %v425 = vpop.f32.mrf.mxu0
    %v426 = vpop.f32.mrf.mxu0
    %v427 = vadd.f32 %v91, %v426
    %v428 = vpop.f32.mrf.mxu0
    %429 = vmatprep.mubr.bf16.mxu0 %v202
    %430 = vmatmul.mubr.bf16.gmra.mxu0 %v201
    %v431 = vpop.f32.mrf.mxu0
    %v432 = vadd.f32 %v91, %v431
    %v433 = vpop.f32.mrf.mxu0
    %v434 = vpop.f32.mrf.mxu0
    %v435 = vadd.f32 %v91, %v434
    %v436 = vpop.f32.mrf.mxu0
    %437 = vmatprep.mubr.bf16.mxu0 %v204
    %438 = vmatmul.mubr.bf16.gmra.mxu0 %v203
    %v439 = vpop.f32.mrf.mxu0
    %v440 = vadd.f32 %v91, %v439
    %v441 = vpop.f32.mrf.mxu0
    %v442 = vpop.f32.mrf.mxu0
    %v443 = vadd.f32 %v91, %v442
    %v444 = vpop.f32.mrf.mxu0
    %445 = vmatprep.mubr.bf16.mxu0 %v206
    %446 = vmatmul.mubr.bf16.gmra.mxu0 %v205
    %v447 = vpop.f32.mrf.mxu0
    %v448 = vadd.f32 %v91, %v447
    %v449 = vpop.f32.mrf.mxu0
    %v450 = vpop.f32.mrf.mxu0
    %v451 = vadd.f32 %v91, %v450
    %v452 = vpop.f32.mrf.mxu0
    %453 = vmatprep.mubr.bf16.mxu0 %v208
    %454 = vmatmul.mubr.bf16.gmra.mxu0 %v207
    %v455 = vpop.f32.mrf.mxu0
    %v456 = vadd.f32 %v91, %v455
    %v457 = vpop.f32.mrf.mxu0
    %v458 = vpop.f32.mrf.mxu0
    %v459 = vadd.f32 %v91, %v458
    %v460 = vpop.f32.mrf.mxu0
    %461 = vmatprep.mubr.bf16.mxu0 %v210
    %462 = vmatmul.mubr.bf16.gmra.mxu0 %v209
    %v463 = vpop.f32.mrf.mxu0
    %v464 = vadd.f32 %v91, %v463
    %v465 = vpop.f32.mrf.mxu0
    %v466 = vpop.f32.mrf.mxu0
    %v467 = vadd.f32 %v91, %v466
    %v468 = vpop.f32.mrf.mxu0
    %469 = vmatprep.mubr.bf16.mxu0 %v212
    %470 = vmatmul.mubr.bf16.gmra.mxu0 %v211
    %v471 = vpop.f32.mrf.mxu0
    %v472 = vadd.f32 %v91, %v471
    %v473 = vpop.f32.mrf.mxu0
    %v474 = vpop.f32.mrf.mxu0
    %v475 = vadd.f32 %v91, %v474
    %v476 = vpop.f32.mrf.mxu0
    %477 = vmatprep.mubr.bf16.mxu0 %v214
    %478 = vmatmul.mubr.bf16.gmra.mxu0 %v213
    %v479 = vpop.f32.mrf.mxu0
    %v480 = vadd.f32 %v91, %v479
    %v481 = vpop.f32.mrf.mxu0
    %v482 = vpop.f32.mrf.mxu0
    %v483 = vadd.f32 %v91, %v482
    %v484 = vpop.f32.mrf.mxu0
    %485 = vmatprep.mubr.bf16.mxu0 %v216
    %486 = vmatmul.mubr.bf16.gmra.mxu0 %v215
    %v487 = vpop.f32.mrf.mxu0
    %v488 = vadd.f32 %v91, %v487
    %v489 = vpop.f32.mrf.mxu0
    %v490 = vpop.f32.mrf.mxu0
    %v491 = vadd.f32 %v91, %v490
    %v492 = vpop.f32.mrf.mxu0
    %493 = vmatprep.mubr.bf16.mxu0 %v218
    %494 = vmatmul.mubr.bf16.gmra.mxu0 %v217
    %v495 = vpop.f32.mrf.mxu0
    %v496 = vadd.f32 %v91, %v495
    %v497 = vpop.f32.mrf.mxu0
    %v498 = vpop.f32.mrf.mxu0
    %v499 = vadd.f32 %v91, %v498
    %v500 = vpop.f32.mrf.mxu0
    %501 = vmatprep.mubr.bf16.mxu0 %v220
    %502 = vmatmul.mubr.bf16.gmra.mxu0 %v219
    %v503 = vpop.f32.mrf.mxu0
    %v504 = vadd.f32 %v91, %v503
    %v505 = vpop.f32.mrf.mxu0
    %v506 = vpop.f32.mrf.mxu0
    %v507 = vadd.f32 %v91, %v506
    %v508 = vpop.f32.mrf.mxu0
    %509 = vdwg.mxu0
    %v510 = vmax.f32 %v384, 0.0
    %v511 = vmax.f32 %v387, 0.0
    %v512 = vmax.f32 %v392, 0.0
    %v513 = vmax.f32 %v395, 0.0
    %v514 = vmax.f32 %v400, 0.0
    %v515 = vmax.f32 %v403, 0.0
    %v516 = vmax.f32 %v408, 0.0
    %v517 = vmax.f32 %v411, 0.0
    %v518 = vmax.f32 %v416, 0.0
    %v519 = vmax.f32 %v419, 0.0
    %v520 = vmax.f32 %v424, 0.0
    %v521 = vmax.f32 %v427, 0.0
    %v522 = vmax.f32 %v432, 0.0
    %v523 = vmax.f32 %v435, 0.0
    %v524 = vmax.f32 %v440, 0.0
    %v525 = vmax.f32 %v443, 0.0
    %v526 = vmax.f32 %v448, 0.0
    %v527 = vmax.f32 %v451, 0.0
    %v528 = vmax.f32 %v456, 0.0
    %v529 = vmax.f32 %v459, 0.0
    %v530 = vmax.f32 %v464, 0.0
    %v531 = vmax.f32 %v467, 0.0
    %v532 = vmax.f32 %v472, 0.0
    %v533 = vmax.f32 %v475, 0.0
    %v534 = vmax.f32 %v480, 0.0
    %v535 = vmax.f32 %v483, 0.0
    %v536 = vmax.f32 %v488, 0.0
    %v537 = vmax.f32 %v491, 0.0
    %v538 = vmax.f32 %v496, 0.0
    %v539 = vmax.f32 %v499, 0.0
    %v540 = vmax.f32 %v504, 0.0
    %v541 = vmax.f32 %v507, 0.0
    %v542 = vpack.c.bf16 %v511, %v510
    %v543 = vpack.c.bf16 %v513, %v512
    %v544 = vpack.c.bf16 %v515, %v514
    %v545 = vpack.c.bf16 %v517, %v516
    %v546 = vpack.c.bf16 %v519, %v518
    %v547 = vpack.c.bf16 %v521, %v520
    %v548 = vpack.c.bf16 %v523, %v522
    %v549 = vpack.c.bf16 %v525, %v524
    %v550 = vpack.c.bf16 %v527, %v526
    %v551 = vpack.c.bf16 %v529, %v528
    %v552 = vpack.c.bf16 %v531, %v530
    %v553 = vpack.c.bf16 %v533, %v532
    %v554 = vpack.c.bf16 %v535, %v534
    %v555 = vpack.c.bf16 %v537, %v536
    %v556 = vpack.c.bf16 %v539, %v538
    %v557 = vpack.c.bf16 %v541, %v540
    %v558 = vld [vmem:[%s3] sm:$0xff]
    %v559 = vld [vmem:[%s3 + $0x8] sm:$0xff]
    %v560 = vld [vmem:[%s3 + $0x10] sm:$0xff]
    %v561 = vld [vmem:[%s3 + $0x18] sm:$0xff]
    %v562 = vld [vmem:[%s3 + $0x20] sm:$0xff]
    %v563 = vld [vmem:[%s3 + $0x28] sm:$0xff]
    %v564 = vld [vmem:[%s3 + $0x30] sm:$0xff]
    %v565 = vld [vmem:[%s3 + $0x38] sm:$0xff]
    %v566 = vld [vmem:[%s3 + $0x40] sm:$0xff]
    %v567 = vld [vmem:[%s3 + $0x48] sm:$0xff]
    %v568 = vld [vmem:[%s3 + $0x50] sm:$0xff]
    %v569 = vld [vmem:[%s3 + $0x58] sm:$0xff]
    %v570 = vld [vmem:[%s3 + $0x60] sm:$0xff]
    %v571 = vld [vmem:[%s3 + $0x68] sm:$0xff]
    %v572 = vld [vmem:[%s3 + $0x70] sm:$0xff]
    %v573 = vld [vmem:[%s3 + $0x78] sm:$0xff]
    %v574 = vld [vmem:[%s4] sm:$0x3]
    %v576 = vlaneseq
    %v577 = vshrl.u32 %v576, 7
    %v578 = vsub.s32 0, %v577
    %v579 = vrot.slane %v574, %v578
    %v580 = vlaneseq
    %v581 = vshrl.u32 %v580, 7
    %v582 = vsub.s32 1, %v581
    %v583 = vrot.slane %v574, %v582
    %v602 = vunpack.c.l.b16 %v558
    %v603 = vunpack.c.h.b16 %v558
    %v604 = vunpack.c.l.b16 %v559
    %v605 = vunpack.c.h.b16 %v559
    %v606 = vunpack.c.l.b16 %v560
    %v607 = vunpack.c.h.b16 %v560
    %v608 = vunpack.c.l.b16 %v561
    %v609 = vunpack.c.h.b16 %v561
    %v610 = vunpack.c.l.b16 %v562
    %v611 = vunpack.c.h.b16 %v562
    %v612 = vunpack.c.l.b16 %v563
    %v613 = vunpack.c.h.b16 %v563
    %v614 = vunpack.c.l.b16 %v564
    %v615 = vunpack.c.h.b16 %v564
    %v616 = vunpack.c.l.b16 %v565
    %v617 = vunpack.c.h.b16 %v565
    %v618 = vunpack.c.l.b16 %v566
    %v619 = vunpack.c.h.b16 %v566
    %v620 = vunpack.c.l.b16 %v567
    %v621 = vunpack.c.h.b16 %v567
    %v622 = vunpack.c.l.b16 %v568
    %v623 = vunpack.c.h.b16 %v568
    %v624 = vunpack.c.l.b16 %v569
    %v625 = vunpack.c.h.b16 %v569
    %v626 = vunpack.c.l.b16 %v570
    %v627 = vunpack.c.h.b16 %v570
    %v628 = vunpack.c.l.b16 %v571
    %v629 = vunpack.c.h.b16 %v571
    %v630 = vunpack.c.l.b16 %v572
    %v631 = vunpack.c.h.b16 %v572
    %v632 = vunpack.c.l.b16 %v573
    %v633 = vunpack.c.h.b16 %v573
    %v634 = vpack.c.b16 %v604, %v602
    %v635 = vpack.c.b16 %v605, %v603
    %v636 = vpack.c.b16 %v608, %v606
    %v637 = vpack.c.b16 %v609, %v607
    %v638 = vpack.c.b16 %v612, %v610
    %v639 = vpack.c.b16 %v613, %v611
    %v640 = vpack.c.b16 %v616, %v614
    %v641 = vpack.c.b16 %v617, %v615
    %v642 = vpack.c.b16 %v620, %v618
    %v643 = vpack.c.b16 %v621, %v619
    %v644 = vpack.c.b16 %v624, %v622
    %v645 = vpack.c.b16 %v625, %v623
    %v646 = vpack.c.b16 %v628, %v626
    %v647 = vpack.c.b16 %v629, %v627
    %v648 = vpack.c.b16 %v632, %v630
    %v649 = vpack.c.b16 %v633, %v631
    %666 = vmatprep.subr.bf16.mxu0 %v649
    %667 = vmatpush1.bf16.msra.mxu0 %v648
    %668 = vmatprep.subr.bf16.mxu0 %v647
    %669 = vmatpush1.bf16.msra.mxu0 %v646
    %670 = vmatprep.subr.bf16.mxu0 %v645
    %671 = vmatpush1.bf16.msra.mxu0 %v644
    %672 = vmatprep.subr.bf16.mxu0 %v643
    %673 = vmatpush1.bf16.msra.mxu0 %v642
    %674 = vmatprep.subr.bf16.mxu0 %v641
    %675 = vmatpush1.bf16.msra.mxu0 %v640
    %676 = vmatprep.subr.bf16.mxu0 %v639
    %677 = vmatpush1.bf16.msra.mxu0 %v638
    %678 = vmatprep.subr.bf16.mxu0 %v637
    %679 = vmatpush1.bf16.msra.mxu0 %v636
    %680 = vmatprep.subr.bf16.mxu0 %v635
    %681 = vmatpush1.bf16.msra.mxu0 %v634
    %682 = vmatprep.subr.bf16.mxu0 0
    %683 = vmatpush2.bf16.msra.mxu0 0
    %684 = vmatprep.subr.bf16.mxu0 0
    %685 = vmatpush2.bf16.msra.mxu0 0
    %686 = vmatprep.subr.bf16.mxu0 0
    %687 = vmatpush2.bf16.msra.mxu0 0
    %688 = vmatprep.subr.bf16.mxu0 0
    %689 = vmatpush2.bf16.msra.mxu0 0
    %690 = vmatprep.subr.bf16.mxu0 0
    %691 = vmatpush2.bf16.msra.mxu0 0
    %692 = vmatprep.subr.bf16.mxu0 0
    %693 = vmatpush2.bf16.msra.mxu0 0
    %694 = vmatprep.subr.bf16.mxu0 0
    %695 = vmatpush2.bf16.msra.mxu0 0
    %696 = vmatprep.subr.bf16.mxu0 0
    %697 = vmatpush2.bf16.msra.mxu0 0
    %698 = vmatprep.mubr.bf16.mxu0 0
    %699 = vmatmul.mubr.bf16.gmra.mxu0 %v542
    %v700 = vpop.f32.mrf.mxu0
    %v701 = vadd.f32 %v579, %v700
    %v702 = vpop.f32.mrf.mxu0
    %v703 = vadd.f32 %v583, %v702
    %v704 = vpop.f32.mrf.mxu0
    %v705 = vadd.f32 %v579, %v704
    %v706 = vpop.f32.mrf.mxu0
    %v707 = vadd.f32 %v583, %v706
    %708 = vmatprep.mubr.bf16.mxu0 0
    %709 = vmatmul.mubr.bf16.gmra.mxu0 %v543
    %v710 = vpop.f32.mrf.mxu0
    %v711 = vadd.f32 %v579, %v710
    %v712 = vpop.f32.mrf.mxu0
    %v713 = vadd.f32 %v583, %v712
    %v714 = vpop.f32.mrf.mxu0
    %v715 = vadd.f32 %v579, %v714
    %v716 = vpop.f32.mrf.mxu0
    %v717 = vadd.f32 %v583, %v716
    %718 = vmatprep.mubr.bf16.mxu0 0
    %719 = vmatmul.mubr.bf16.gmra.mxu0 %v544
    %v720 = vpop.f32.mrf.mxu0
    %v721 = vadd.f32 %v579, %v720
    %v722 = vpop.f32.mrf.mxu0
    %v723 = vadd.f32 %v583, %v722
    %v724 = vpop.f32.mrf.mxu0
    %v725 = vadd.f32 %v579, %v724
    %v726 = vpop.f32.mrf.mxu0
    %v727 = vadd.f32 %v583, %v726
    %728 = vmatprep.mubr.bf16.mxu0 0
    %729 = vmatmul.mubr.bf16.gmra.mxu0 %v545
    %v730 = vpop.f32.mrf.mxu0
    %v731 = vadd.f32 %v579, %v730
    %v732 = vpop.f32.mrf.mxu0
    %v733 = vadd.f32 %v583, %v732
    %v734 = vpop.f32.mrf.mxu0
    %v735 = vadd.f32 %v579, %v734
    %v736 = vpop.f32.mrf.mxu0
    %v737 = vadd.f32 %v583, %v736
    %738 = vmatprep.mubr.bf16.mxu0 0
    %739 = vmatmul.mubr.bf16.gmra.mxu0 %v546
    %v740 = vpop.f32.mrf.mxu0
    %v741 = vadd.f32 %v579, %v740
    %v742 = vpop.f32.mrf.mxu0
    %v743 = vadd.f32 %v583, %v742
    %v744 = vpop.f32.mrf.mxu0
    %v745 = vadd.f32 %v579, %v744
    %v746 = vpop.f32.mrf.mxu0
    %v747 = vadd.f32 %v583, %v746
    %748 = vmatprep.mubr.bf16.mxu0 0
    %749 = vmatmul.mubr.bf16.gmra.mxu0 %v547
    %v750 = vpop.f32.mrf.mxu0
    %v751 = vadd.f32 %v579, %v750
    %v752 = vpop.f32.mrf.mxu0
    %v753 = vadd.f32 %v583, %v752
    %v754 = vpop.f32.mrf.mxu0
    %v755 = vadd.f32 %v579, %v754
    %v756 = vpop.f32.mrf.mxu0
    %v757 = vadd.f32 %v583, %v756
    %758 = vmatprep.mubr.bf16.mxu0 0
    %759 = vmatmul.mubr.bf16.gmra.mxu0 %v548
    %v760 = vpop.f32.mrf.mxu0
    %v761 = vadd.f32 %v579, %v760
    %v762 = vpop.f32.mrf.mxu0
    %v763 = vadd.f32 %v583, %v762
    %v764 = vpop.f32.mrf.mxu0
    %v765 = vadd.f32 %v579, %v764
    %v766 = vpop.f32.mrf.mxu0
    %v767 = vadd.f32 %v583, %v766
    %768 = vmatprep.mubr.bf16.mxu0 0
    %769 = vmatmul.mubr.bf16.gmra.mxu0 %v549
    %v770 = vpop.f32.mrf.mxu0
    %v771 = vadd.f32 %v579, %v770
    %v772 = vpop.f32.mrf.mxu0
    %v773 = vadd.f32 %v583, %v772
    %v774 = vpop.f32.mrf.mxu0
    %v775 = vadd.f32 %v579, %v774
    %v776 = vpop.f32.mrf.mxu0
    %v777 = vadd.f32 %v583, %v776
    %778 = vmatprep.mubr.bf16.mxu0 0
    %779 = vmatmul.mubr.bf16.gmra.mxu0 %v550
    %v780 = vpop.f32.mrf.mxu0
    %v781 = vadd.f32 %v579, %v780
    %v782 = vpop.f32.mrf.mxu0
    %v783 = vadd.f32 %v583, %v782
    %v784 = vpop.f32.mrf.mxu0
    %v785 = vadd.f32 %v579, %v784
    %v786 = vpop.f32.mrf.mxu0
    %v787 = vadd.f32 %v583, %v786
    %788 = vmatprep.mubr.bf16.mxu0 0
    %789 = vmatmul.mubr.bf16.gmra.mxu0 %v551
    %v790 = vpop.f32.mrf.mxu0
    %v791 = vadd.f32 %v579, %v790
    %v792 = vpop.f32.mrf.mxu0
    %v793 = vadd.f32 %v583, %v792
    %v794 = vpop.f32.mrf.mxu0
    %v795 = vadd.f32 %v579, %v794
    %v796 = vpop.f32.mrf.mxu0
    %v797 = vadd.f32 %v583, %v796
    %798 = vmatprep.mubr.bf16.mxu0 0
    %799 = vmatmul.mubr.bf16.gmra.mxu0 %v552
    %v800 = vpop.f32.mrf.mxu0
    %v801 = vadd.f32 %v579, %v800
    %v802 = vpop.f32.mrf.mxu0
    %v803 = vadd.f32 %v583, %v802
    %v804 = vpop.f32.mrf.mxu0
    %v805 = vadd.f32 %v579, %v804
    %v806 = vpop.f32.mrf.mxu0
    %v807 = vadd.f32 %v583, %v806
    %808 = vmatprep.mubr.bf16.mxu0 0
    %809 = vmatmul.mubr.bf16.gmra.mxu0 %v553
    %v810 = vpop.f32.mrf.mxu0
    %v811 = vadd.f32 %v579, %v810
    %v812 = vpop.f32.mrf.mxu0
    %v813 = vadd.f32 %v583, %v812
    %v814 = vpop.f32.mrf.mxu0
    %v815 = vadd.f32 %v579, %v814
    %v816 = vpop.f32.mrf.mxu0
    %v817 = vadd.f32 %v583, %v816
    %818 = vmatprep.mubr.bf16.mxu0 0
    %819 = vmatmul.mubr.bf16.gmra.mxu0 %v554
    %v820 = vpop.f32.mrf.mxu0
    %v821 = vadd.f32 %v579, %v820
    %v822 = vpop.f32.mrf.mxu0
    %v823 = vadd.f32 %v583, %v822
    %v824 = vpop.f32.mrf.mxu0
    %v825 = vadd.f32 %v579, %v824
    %v826 = vpop.f32.mrf.mxu0
    %v827 = vadd.f32 %v583, %v826
    %828 = vmatprep.mubr.bf16.mxu0 0
    %829 = vmatmul.mubr.bf16.gmra.mxu0 %v555
    %v830 = vpop.f32.mrf.mxu0
    %v831 = vadd.f32 %v579, %v830
    %v832 = vpop.f32.mrf.mxu0
    %v833 = vadd.f32 %v583, %v832
    %v834 = vpop.f32.mrf.mxu0
    %v835 = vadd.f32 %v579, %v834
    %v836 = vpop.f32.mrf.mxu0
    %v837 = vadd.f32 %v583, %v836
    %838 = vmatprep.mubr.bf16.mxu0 0
    %839 = vmatmul.mubr.bf16.gmra.mxu0 %v556
    %v840 = vpop.f32.mrf.mxu0
    %v841 = vadd.f32 %v579, %v840
    %v842 = vpop.f32.mrf.mxu0
    %v843 = vadd.f32 %v583, %v842
    %v844 = vpop.f32.mrf.mxu0
    %v845 = vadd.f32 %v579, %v844
    %v846 = vpop.f32.mrf.mxu0
    %v847 = vadd.f32 %v583, %v846
    %848 = vmatprep.mubr.bf16.mxu0 0
    %849 = vmatmul.mubr.bf16.gmra.mxu0 %v557
    %v850 = vpop.f32.mrf.mxu0
    %v851 = vadd.f32 %v579, %v850
    %v852 = vpop.f32.mrf.mxu0
    %v853 = vadd.f32 %v583, %v852
    %v854 = vpop.f32.mrf.mxu0
    %v855 = vadd.f32 %v579, %v854
    %v856 = vpop.f32.mrf.mxu0
    %v857 = vadd.f32 %v583, %v856
    %858 = vdwg.mxu0
    %v859 = vpack.c.bf16 %v705, %v701
    %v860 = vpack.c.bf16 %v707, %v703
    %v861 = vpack.c.bf16 %v715, %v711
    %v862 = vpack.c.bf16 %v717, %v713
    %v863 = vpack.c.bf16 %v725, %v721
    %v864 = vpack.c.bf16 %v727, %v723
    %v865 = vpack.c.bf16 %v735, %v731
    %v866 = vpack.c.bf16 %v737, %v733
    %v867 = vpack.c.bf16 %v745, %v741
    %v868 = vpack.c.bf16 %v747, %v743
    %v869 = vpack.c.bf16 %v755, %v751
    %v870 = vpack.c.bf16 %v757, %v753
    %v871 = vpack.c.bf16 %v765, %v761
    %v872 = vpack.c.bf16 %v767, %v763
    %v873 = vpack.c.bf16 %v775, %v771
    %v874 = vpack.c.bf16 %v777, %v773
    %v875 = vpack.c.bf16 %v785, %v781
    %v876 = vpack.c.bf16 %v787, %v783
    %v877 = vpack.c.bf16 %v795, %v791
    %v878 = vpack.c.bf16 %v797, %v793
    %v879 = vpack.c.bf16 %v805, %v801
    %v880 = vpack.c.bf16 %v807, %v803
    %v881 = vpack.c.bf16 %v815, %v811
    %v882 = vpack.c.bf16 %v817, %v813
    %v883 = vpack.c.bf16 %v825, %v821
    %v884 = vpack.c.bf16 %v827, %v823
    %v885 = vpack.c.bf16 %v835, %v831
    %v886 = vpack.c.bf16 %v837, %v833
    %v887 = vpack.c.bf16 %v845, %v841
    %v888 = vpack.c.bf16 %v847, %v843
    %v889 = vpack.c.bf16 %v855, %v851
    %v890 = vpack.c.bf16 %v857, %v853
    %v923 = vunpack.c.l.b16 %v859
    %v924 = vunpack.c.l.b16 %v860
    %v925 = vunpack.c.h.b16 %v859
    %v926 = vunpack.c.h.b16 %v860
    %v927 = vunpack.c.l.b16 %v861
    %v928 = vunpack.c.l.b16 %v862
    %v929 = vunpack.c.h.b16 %v861
    %v930 = vunpack.c.h.b16 %v862
    %v931 = vunpack.c.l.b16 %v863
    %v932 = vunpack.c.l.b16 %v864
    %v933 = vunpack.c.h.b16 %v863
    %v934 = vunpack.c.h.b16 %v864
    %v935 = vunpack.c.l.b16 %v865
    %v936 = vunpack.c.l.b16 %v866
    %v937 = vunpack.c.h.b16 %v865
    %v938 = vunpack.c.h.b16 %v866
    %v939 = vunpack.c.l.b16 %v867
    %v940 = vunpack.c.l.b16 %v868
    %v941 = vunpack.c.h.b16 %v867
    %v942 = vunpack.c.h.b16 %v868
    %v943 = vunpack.c.l.b16 %v869
    %v944 = vunpack.c.l.b16 %v870
    %v945 = vunpack.c.h.b16 %v869
    %v946 = vunpack.c.h.b16 %v870
    %v947 = vunpack.c.l.b16 %v871
    %v948 = vunpack.c.l.b16 %v872
    %v949 = vunpack.c.h.b16 %v871
    %v950 = vunpack.c.h.b16 %v872
    %v951 = vunpack.c.l.b16 %v873
    %v952 = vunpack.c.l.b16 %v874
    %v953 = vunpack.c.h.b16 %v873
    %v954 = vunpack.c.h.b16 %v874
    %v955 = vunpack.c.l.b16 %v875
    %v956 = vunpack.c.l.b16 %v876
    %v957 = vunpack.c.h.b16 %v875
    %v958 = vunpack.c.h.b16 %v876
    %v959 = vunpack.c.l.b16 %v877
    %v960 = vunpack.c.l.b16 %v878
    %v961 = vunpack.c.h.b16 %v877
    %v962 = vunpack.c.h.b16 %v878
    %v963 = vunpack.c.l.b16 %v879
    %v964 = vunpack.c.l.b16 %v880
    %v965 = vunpack.c.h.b16 %v879
    %v966 = vunpack.c.h.b16 %v880
    %v967 = vunpack.c.l.b16 %v881
    %v968 = vunpack.c.l.b16 %v882
    %v969 = vunpack.c.h.b16 %v881
    %v970 = vunpack.c.h.b16 %v882
    %v971 = vunpack.c.l.b16 %v883
    %v972 = vunpack.c.l.b16 %v884
    %v973 = vunpack.c.h.b16 %v883
    %v974 = vunpack.c.h.b16 %v884
    %v975 = vunpack.c.l.b16 %v885
    %v976 = vunpack.c.l.b16 %v886
    %v977 = vunpack.c.h.b16 %v885
    %v978 = vunpack.c.h.b16 %v886
    %v979 = vunpack.c.l.b16 %v887
    %v980 = vunpack.c.l.b16 %v888
    %v981 = vunpack.c.h.b16 %v887
    %v982 = vunpack.c.h.b16 %v888
    %v983 = vunpack.c.l.b16 %v889
    %v984 = vunpack.c.l.b16 %v890
    %v985 = vunpack.c.h.b16 %v889
    %v986 = vunpack.c.h.b16 %v890
    %v987 = vpack.c.b16 %v924, %v923
    %v988 = vpack.c.b16 %v926, %v925
    %v989 = vpack.c.b16 %v928, %v927
    %v990 = vpack.c.b16 %v930, %v929
    %v991 = vpack.c.b16 %v932, %v931
    %v992 = vpack.c.b16 %v934, %v933
    %v993 = vpack.c.b16 %v936, %v935
    %v994 = vpack.c.b16 %v938, %v937
    %v995 = vpack.c.b16 %v940, %v939
    %v996 = vpack.c.b16 %v942, %v941
    %v997 = vpack.c.b16 %v944, %v943
    %v998 = vpack.c.b16 %v946, %v945
    %v999 = vpack.c.b16 %v948, %v947
    %v1000 = vpack.c.b16 %v950, %v949
    %v1001 = vpack.c.b16 %v952, %v951
    %v1002 = vpack.c.b16 %v954, %v953
    %v1003 = vpack.c.b16 %v956, %v955
    %v1004 = vpack.c.b16 %v958, %v957
    %v1005 = vpack.c.b16 %v960, %v959
    %v1006 = vpack.c.b16 %v962, %v961
    %v1007 = vpack.c.b16 %v964, %v963
    %v1008 = vpack.c.b16 %v966, %v965
    %v1009 = vpack.c.b16 %v968, %v967
    %v1010 = vpack.c.b16 %v970, %v969
    %v1011 = vpack.c.b16 %v972, %v971
    %v1012 = vpack.c.b16 %v974, %v973
    %v1013 = vpack.c.b16 %v976, %v975
    %v1014 = vpack.c.b16 %v978, %v977
    %v1015 = vpack.c.b16 %v980, %v979
    %v1016 = vpack.c.b16 %v982, %v981
    %v1017 = vpack.c.b16 %v984, %v983
    %v1018 = vpack.c.b16 %v986, %v985
    %1051 = vst [vmem:[#allocation2] sm:$0xff] %v987
    %1052 = vst [vmem:[#allocation2 + $0x8] sm:$0xff] %v988
    %1053 = vst [vmem:[#allocation2 + $0x10] sm:$0xff] %v989
    %1054 = vst [vmem:[#allocation2 + $0x18] sm:$0xff] %v990
    %1055 = vst [vmem:[#allocation2 + $0x20] sm:$0xff] %v991
    %1056 = vst [vmem:[#allocation2 + $0x28] sm:$0xff] %v992
    %1057 = vst [vmem:[#allocation2 + $0x30] sm:$0xff] %v993
    %1058 = vst [vmem:[#allocation2 + $0x38] sm:$0xff] %v994
    %1059 = vst [vmem:[#allocation2 + $0x40] sm:$0xff] %v995
    %1060 = vst [vmem:[#allocation2 + $0x48] sm:$0xff] %v996
    %1061 = vst [vmem:[#allocation2 + $0x50] sm:$0xff] %v997
    %1062 = vst [vmem:[#allocation2 + $0x58] sm:$0xff] %v998
    %1063 = vst [vmem:[#allocation2 + $0x60] sm:$0xff] %v999
    %1064 = vst [vmem:[#allocation2 + $0x68] sm:$0xff] %v1000
    %1065 = vst [vmem:[#allocation2 + $0x70] sm:$0xff] %v1001
    %1066 = vst [vmem:[#allocation2 + $0x78] sm:$0xff] %v1002
    %1067 = vst [vmem:[#allocation2 + $0x80] sm:$0xff] %v1003
    %1068 = vst [vmem:[#allocation2 + $0x88] sm:$0xff] %v1004
    %1069 = vst [vmem:[#allocation2 + $0x90] sm:$0xff] %v1005
    %1070 = vst [vmem:[#allocation2 + $0x98] sm:$0xff] %v1006
    %1071 = vst [vmem:[#allocation2 + $0xa0] sm:$0xff] %v1007
    %1072 = vst [vmem:[#allocation2 + $0xa8] sm:$0xff] %v1008
    %1073 = vst [vmem:[#allocation2 + $0xb0] sm:$0xff] %v1009
    %1074 = vst [vmem:[#allocation2 + $0xb8] sm:$0xff] %v1010
    %1075 = vst [vmem:[#allocation2 + $0xc0] sm:$0xff] %v1011
    %1076 = vst [vmem:[#allocation2 + $0xc8] sm:$0xff] %v1012
    %1077 = vst [vmem:[#allocation2 + $0xd0] sm:$0xff] %v1013
    %1078 = vst [vmem:[#allocation2 + $0xd8] sm:$0xff] %v1014
    %1079 = vst [vmem:[#allocation2 + $0xe0] sm:$0xff] %v1015
    %1080 = vst [vmem:[#allocation2 + $0xe8] sm:$0xff] %v1016
    %1081 = vst [vmem:[#allocation2 + $0xf0] sm:$0xff] %v1017
    %1082 = vst [vmem:[#allocation2 + $0xf8] sm:$0xff] %v1018
    // Predicated region
    $region22: #{audio_encoder_forward.1} parent=1 // pred_check
      _
    $region23: #{audio_encoder_forward.1} parent=1 // pred_check_branch
      %1084 = sbr.rel (0) target = $region25
    $region24: #{audio_encoder_forward.1} parent=1 // pred_region
      %s1086 = ssub.s32 4096, 256
      %1087 = vsyncadd [#allocation3], %s1086
      %s1088 = sshll.u32 [#allocation2], 4
      %s1089 = int_to_ptr.vmem [resolvable:$true] %s1088
      %1094 = dma.vmem_to_hbm [thread:$0]  %s1089, 256, %s5, [#allocation3], 128, 128, 8
    $region25: #{audio_encoder_forward.1} parent=1 // pred_fallthru
      _
    // Predicated region
    $region26: #{audio_encoder_forward.1} parent=1 // pred_check
      _
    $region27: #{audio_encoder_forward.1} parent=1 // pred_check_branch
      %1096 = sbr.rel (0) target = $region29
    $region28: #{audio_encoder_forward.1} parent=1 // pred_region
      %1097 = dma.done [#allocation3], 4096
    $region29: #{audio_encoder_forward.1} parent=1 // pred_fallthru
      _
    %1098 = vsyncpa [#allocation3], 1

</llo_original>
